<compile_context>
chip_gen: v7x
topology: tpu7x:2x2x1
jax: 0.10.0
libtpu: 0.0.40
codegen_flags: <defaults>
</compile_context>

<pallas_src>
import jax
import jax.numpy as jnp
from jax.experimental import pallas as pl
from jax.experimental.pallas import tpu as pltpu


def attention_kernel(hidden_ref, enc_ref, mask_ref,
                     wh_ref, we_ref, b_ref, v_ref, out_ref):
    S, TB, enc2 = enc_ref.shape
    dec_hid = wh_ref.shape[1]

    # hidden contribution of self.attn, bias folded in here (one (TB, dec)
    # add instead of a full (S, TB, dec) add).
    hb = jnp.dot(hidden_ref[...], wh_ref[...],
                 preferred_element_type=jnp.float32) + b_ref[...]        # (TB, dec)

    # encoder-output contribution, computed directly on the native
    # [S, B, 2*enc_hid] layout (lane dim untouched by the reshape).
    e_proj = jnp.dot(enc_ref[...].reshape(S * TB, enc2), we_ref[...],
                     preferred_element_type=jnp.float32)                 # (S*TB, dec)
    e_proj = e_proj.reshape(S, TB, dec_hid)

    energy = jnp.tanh(e_proj + hb[None, :, :])                           # (S, TB, dec)

    # self.v projection as VPU multiply + lane reduce (avoids a width-1 MXU
    # matmul and its relayout).
    v_row = v_ref[...].reshape(1, 1, dec_hid)                            # (1, 1, dec)
    scores_sb = jnp.sum(energy * v_row, axis=-1)                         # (S, TB)

    # tiny in-VMEM transpose so masking / softmax / store are lane-dense
    # along the src_len axis and the output is written in (B, S) layout.
    scores = jnp.transpose(scores_sb)                                    # (TB, S)

    # masked_fill(mask == 0, -1e10)
    scores = jnp.where(mask_ref[...] == 0, jnp.float32(-1e10), scores)

    # numerically-stable softmax over src_len (last axis)
    m = jnp.max(scores, axis=-1, keepdims=True)
    e = jnp.exp(scores - m)
    denom = jnp.sum(e, axis=-1, keepdims=True)
    out_ref[...] = e * pl.reciprocal(denom, approx=True)


def _pick_batch_tile(B, S, enc2, dec_hid, vmem_budget_bytes=4 << 20):
    """Batch tile: multiple of 8 (sublane) dividing B, per-block working set
    (double-buffered bf16 enc block + f32 e_proj/energy intermediates) kept
    well under the scoped-VMEM defaults of v5e (16 MiB) / v7x (32 of 64 MiB).
    Small or odd batches fall back to a single whole-B block."""
    if B <= 8 or B % 8 != 0:
        return B

    def blk_bytes(tb):
        enc_blk = 2 * S * tb * enc2 * 2          # 2 pipeline buffers, bf16
        interm = 2 * S * tb * dec_hid * 4        # e_proj + energy, f32
        return enc_blk + interm

    tb = 8
    while (tb * 2 <= B and B % (tb * 2) == 0
           and blk_bytes(tb * 2) <= vmem_budget_bytes):
        tb *= 2
    return tb


def attention_forward(hidden, encoder_outputs, mask, params):
    """hidden: [B, dec_hid]; encoder_outputs: [S, B, 2*enc_hid]; mask: [B, S]."""
    W_attn, b_attn, v_w = params["W_attn"], params["b_attn"], params["v"]
    dec_hid = W_attn.shape[0]
    S, B, enc2 = encoder_outputs.shape

    # concat order in PyTorch is (hidden, encoder_outputs) along the feature
    # dim, so the first dec_hid input columns of W_attn act on hidden.
    W_h = W_attn[:, :dec_hid].T.astype(jnp.bfloat16)     # (dec_hid, dec_hid)
    W_e = W_attn[:, dec_hid:].T.astype(jnp.bfloat16)     # (2*enc_hid, dec_hid)
    b = b_attn.reshape(1, dec_hid).astype(jnp.float32)
    v = v_w.reshape(1, dec_hid).astype(jnp.float32)

    TB = _pick_batch_tile(B, S, enc2, dec_hid)
    grid = (B // TB,)

    return pl.pallas_call(
        attention_kernel,
        out_shape=jax.ShapeDtypeStruct((B, S), jnp.float32),
        grid=grid,
        in_specs=[
            pl.BlockSpec((TB, dec_hid), lambda i: (i, 0)),        # hidden
            pl.BlockSpec((S, TB, enc2), lambda i: (0, i, 0)),     # encoder_outputs
            pl.BlockSpec((TB, S), lambda i: (i, 0)),              # mask
            pl.BlockSpec((dec_hid, dec_hid), lambda i: (0, 0)),   # W_h (resident)
            pl.BlockSpec((enc2, dec_hid), lambda i: (0, 0)),      # W_e (resident)
            pl.BlockSpec((1, dec_hid), lambda i: (0, 0)),         # bias (resident)
            pl.BlockSpec((1, dec_hid), lambda i: (0, 0)),         # v    (resident)
        ],
        out_specs=pl.BlockSpec((TB, S), lambda i: (i, 0)),
        compiler_params=pltpu.CompilerParams(
            dimension_semantics=("parallel",)),
    )(hidden.astype(jnp.bfloat16),
      encoder_outputs.astype(jnp.bfloat16),
      mask.astype(jnp.int32),
      W_h, W_e, b, v)


attention_forward = jax.jit(attention_forward)


def init_params(key, enc_hid_dim, dec_hid_dim):
    in_dim = enc_hid_dim * 2 + dec_hid_dim
    k1, k2, k3 = jax.random.split(key, 3)
    bound_attn = 1.0 / jnp.sqrt(in_dim)
    bound_v = 1.0 / jnp.sqrt(dec_hid_dim)
    return {
        # nn.Linear(in_dim, dec_hid_dim): weight [dec_hid, in_dim], bias [dec_hid]
        "W_attn": jax.random.uniform(k1, (dec_hid_dim, in_dim), jnp.float32,
                                     -bound_attn, bound_attn),
        "b_attn": jax.random.uniform(k2, (dec_hid_dim,), jnp.float32,
                                     -bound_attn, bound_attn),
        # nn.Linear(dec_hid_dim, 1, bias=False): weight [1, dec_hid]
        "v": jax.random.uniform(k3, (1, dec_hid_dim), jnp.float32,
                                -bound_v, bound_v),
    }


def reference_attention(hidden, encoder_outputs, mask, params):
    """Pure-JAX reference (same bf16 rounding of matmul inputs as the kernel)."""
    W_attn, b_attn, v_w = params["W_attn"], params["b_attn"], params["v"]
    dec_hid = W_attn.shape[0]
    h = hidden.astype(jnp.bfloat16).astype(jnp.float32)
    enc = jnp.transpose(encoder_outputs, (1, 0, 2)).astype(jnp.bfloat16).astype(jnp.float32)
    W_h = W_attn[:, :dec_hid].T.astype(jnp.bfloat16).astype(jnp.float32)
    W_e = W_attn[:, dec_hid:].T.astype(jnp.bfloat16).astype(jnp.float32)
    energy = jnp.tanh(h[:, None, :] @ W_h + enc @ W_e + b_attn[None, None, :])
    scores = jnp.einsum("bsd,d->bs", energy, v_w[0])
    scores = jnp.where(mask == 0, jnp.float32(-1e10), scores)
    return jax.nn.softmax(scores, axis=1)


if __name__ == "__main__":
    enc_hid_dim, dec_hid_dim = 16, 32
    B, S = 2, 8

    key = jax.random.PRNGKey(0)
    kp, kh, ke = jax.random.split(key, 3)

    params = init_params(kp, enc_hid_dim, dec_hid_dim)
    hidden = jax.random.normal(kh, (B, dec_hid_dim), jnp.float32)
    encoder_outputs = jax.random.normal(ke, (S, B, enc_hid_dim * 2), jnp.float32)
    # mask: last 2 positions of batch element 1 are padding
    mask = jnp.ones((B, S), jnp.int32).at[1, -2:].set(0)

    out = attention_forward(hidden, encoder_outputs, mask, params)
    out = jax.block_until_ready(out)

    ref = reference_attention(hidden, encoder_outputs, mask, params)

    # sanity: shape, rows sum to ~1, padded positions ~0, matches reference
    assert out.shape == (B, S)
    assert jnp.allclose(jnp.sum(out, axis=1), 1.0, atol=5e-3)
    assert float(jnp.max(out[1, -2:])) < 1e-6
    assert jnp.allclose(out, ref, atol=5e-3), float(jnp.max(jnp.abs(out - ref)))

    print("KERNEL_OK")
</pallas_src>

<mosaic_0001>
module attributes {stable_mosaic.version = 11 : i64} {
  func.func @attention_kernel(%arg0: i32, %arg1: memref<2x32xbf16, #tpu.memory_space<vmem>>, %arg2: memref<8x2x32xbf16, #tpu.memory_space<vmem>>, %arg3: memref<2x8xi32, #tpu.memory_space<vmem>>, %arg4: memref<32x32xbf16, #tpu.memory_space<vmem>>, %arg5: memref<32x32xbf16, #tpu.memory_space<vmem>>, %arg6: memref<1x32xf32, #tpu.memory_space<vmem>>, %arg7: memref<1x32xf32, #tpu.memory_space<vmem>>, %arg8: memref<2x8xf32, #tpu.memory_space<vmem>>) attributes {dimension_semantics = [#tpu.dimension_semantics<parallel>], iteration_bounds = array<i64: 1>, scalar_prefetch = 0 : i64, scratch_operands = 0 : i64, tpu.core_type = #tpu.core_type<tc>, window_params = [{transform_indices = @transform_0, window_bounds = array<i64: 2, 32>}, {transform_indices = @transform_1, window_bounds = array<i64: 8, 2, 32>}, {transform_indices = @transform_2, window_bounds = array<i64: 2, 8>}, {pipeline_mode = #tpu.pipeline_mode<synchronous>, transform_indices = @transform_3, window_bounds = array<i64: 32, 32>}, {pipeline_mode = #tpu.pipeline_mode<synchronous>, transform_indices = @transform_4, window_bounds = array<i64: 32, 32>}, {pipeline_mode = #tpu.pipeline_mode<synchronous>, transform_indices = @transform_5, window_bounds = array<i64: 1, 32>}, {pipeline_mode = #tpu.pipeline_mode<synchronous>, transform_indices = @transform_6, window_bounds = array<i64: 1, 32>}, {transform_indices = @transform_7, window_bounds = array<i64: 2, 8>}]} {
    %c0 = arith.constant 0 : index
    %c0_0 = arith.constant 0 : index
    %0 = vector.load %arg1[%c0, %c0_0] : memref<2x32xbf16, #tpu.memory_space<vmem>>, vector<2x32xbf16>
    %c0_1 = arith.constant 0 : index
    %c0_2 = arith.constant 0 : index
    %1 = vector.load %arg4[%c0_1, %c0_2] : memref<32x32xbf16, #tpu.memory_space<vmem>>, vector<32x32xbf16>
    %cst = arith.constant dense<0.000000e+00> : vector<2x32xf32>
    %2 = tpu.matmul %0, %1, %cst {dimension_numbers = #tpu.dot_dimension_numbers<[1], [0], [0], [1], [0, 0, 1, 1], [], []>} : vector<2x32xbf16>, vector<32x32xbf16>, vector<2x32xf32> -> vector<2x32xf32>
    %c0_3 = arith.constant 0 : index
    %c0_4 = arith.constant 0 : index
    %3 = vector.load %arg6[%c0_3, %c0_4] : memref<1x32xf32, #tpu.memory_space<vmem>>, vector<1x32xf32>
    %4 = vector.broadcast %3 : vector<1x32xf32> to vector<2x32xf32>
    %5 = arith.addf %2, %4 : vector<2x32xf32>
    %c0_5 = arith.constant 0 : index
    %c0_6 = arith.constant 0 : index
    %c0_7 = arith.constant 0 : index
    %6 = vector.load %arg2[%c0_5, %c0_6, %c0_7] : memref<8x2x32xbf16, #tpu.memory_space<vmem>>, vector<8x2x32xbf16>
    %7 = vector.shape_cast %6 : vector<8x2x32xbf16> to vector<16x32xbf16>
    %c0_8 = arith.constant 0 : index
    %c0_9 = arith.constant 0 : index
    %8 = vector.load %arg5[%c0_8, %c0_9] : memref<32x32xbf16, #tpu.memory_space<vmem>>, vector<32x32xbf16>
    %cst_10 = arith.constant dense<0.000000e+00> : vector<16x32xf32>
    %9 = tpu.matmul %7, %8, %cst_10 {dimension_numbers = #tpu.dot_dimension_numbers<[1], [0], [0], [1], [0, 0, 1, 1], [], []>} : vector<16x32xbf16>, vector<32x32xbf16>, vector<16x32xf32> -> vector<16x32xf32>
    %10 = vector.shape_cast %9 : vector<16x32xf32> to vector<8x2x32xf32>
    %11 = vector.shape_cast %5 : vector<2x32xf32> to vector<1x2x32xf32>
    %12 = vector.broadcast %11 : vector<1x2x32xf32> to vector<8x2x32xf32>
    %13 = arith.addf %10, %12 : vector<8x2x32xf32>
    %14 = math.tanh %13 : vector<8x2x32xf32>
    %c0_11 = arith.constant 0 : index
    %c0_12 = arith.constant 0 : index
    %15 = vector.load %arg7[%c0_11, %c0_12] : memref<1x32xf32, #tpu.memory_space<vmem>>, vector<1x32xf32>
    %16 = vector.shape_cast %15 : vector<1x32xf32> to vector<1x1x32xf32>
    %17 = vector.broadcast %16 : vector<1x1x32xf32> to vector<8x2x32xf32>
    %18 = arith.mulf %14, %17 : vector<8x2x32xf32>
    %cst_13 = arith.constant dense<0.000000e+00> : vector<8x2xf32>
    %19 = vector.multi_reduction <add>, %18, %cst_13 [2] : vector<8x2x32xf32> to vector<8x2xf32>
    %20 = tpu.transpose %19, [1, 0] : vector<8x2xf32> -> vector<2x8xf32>
    %c0_14 = arith.constant 0 : index
    %c0_15 = arith.constant 0 : index
    %21 = vector.load %arg3[%c0_14, %c0_15] : memref<2x8xi32, #tpu.memory_space<vmem>>, vector<2x8xi32>
    %c0_i32 = arith.constant 0 : i32
    %22 = vector.broadcast %c0_i32 : i32 to vector<2x8xi32>
    %23 = arith.cmpi eq, %21, %22 : vector<2x8xi32>
    %cst_16 = arith.constant -1.000000e+10 : f32
    %24 = vector.broadcast %cst_16 : f32 to vector<2x8xf32>
    %25 = arith.select %23, %24, %20 : vector<2x8xi1>, vector<2x8xf32>
    %cst_17 = arith.constant dense<0xFF800000> : vector<2xf32>
    %26 = vector.multi_reduction <maximumf>, %25, %cst_17 [1] : vector<2x8xf32> to vector<2xf32>
    %27 = vector.shape_cast %26 : vector<2xf32> to vector<2x1xf32>
    %28 = vector.broadcast %27 : vector<2x1xf32> to vector<2x8xf32>
    %29 = arith.subf %25, %28 : vector<2x8xf32>
    %30 = math.exp %29 : vector<2x8xf32>
    %cst_18 = arith.constant dense<0.000000e+00> : vector<2xf32>
    %31 = vector.multi_reduction <add>, %30, %cst_18 [1] : vector<2x8xf32> to vector<2xf32>
    %32 = vector.shape_cast %31 : vector<2xf32> to vector<2x1xf32>
    %33 = tpu.reciprocal %32 {approx = true} : vector<2x1xf32> -> vector<2x1xf32>
    %34 = vector.broadcast %33 : vector<2x1xf32> to vector<2x8xf32>
    %35 = arith.mulf %30, %34 : vector<2x8xf32>
    %c0_19 = arith.constant 0 : index
    %c0_20 = arith.constant 0 : index
    %36 = vector.load %arg8[%c0_19, %c0_20] : memref<2x8xf32, #tpu.memory_space<vmem>>, vector<2x8xf32>
    tpu.vector_store %arg8[%c0_19, %c0_20], %35 {strides = array<i32>} : memref<2x8xf32, #tpu.memory_space<vmem>>, vector<2x8xf32>,
    return
  }
  func.func @transform_0(%arg0: i32) -> (i32, i32) {
    %c0_i32 = arith.constant 0 : i32
    %c0_i32_0 = arith.constant 0 : i32
    return %arg0, %c0_i32 : i32, i32
  }
  func.func @transform_1(%arg0: i32) -> (i32, i32, i32) {
    %c0_i32 = arith.constant 0 : i32
    %c0_i32_0 = arith.constant 0 : i32
    %c0_i32_1 = arith.constant 0 : i32
    return %c0_i32, %arg0, %c0_i32_0 : i32, i32, i32
  }
  func.func @transform_2(%arg0: i32) -> (i32, i32) {
    %c0_i32 = arith.constant 0 : i32
    %c0_i32_0 = arith.constant 0 : i32
    return %arg0, %c0_i32 : i32, i32
  }
  func.func @transform_3(%arg0: i32) -> (i32, i32) {
    %c0_i32 = arith.constant 0 : i32
    %c0_i32_0 = arith.constant 0 : i32
    %c0_i32_1 = arith.constant 0 : i32
    return %c0_i32, %c0_i32_0 : i32, i32
  }
  func.func @transform_4(%arg0: i32) -> (i32, i32) {
    %c0_i32 = arith.constant 0 : i32
    %c0_i32_0 = arith.constant 0 : i32
    %c0_i32_1 = arith.constant 0 : i32
    return %c0_i32, %c0_i32_0 : i32, i32
  }
  func.func @transform_5(%arg0: i32) -> (i32, i32) {
    %c0_i32 = arith.constant 0 : i32
    %c0_i32_0 = arith.constant 0 : i32
    %c0_i32_1 = arith.constant 0 : i32
    return %c0_i32, %c0_i32_0 : i32, i32
  }
  func.func @transform_6(%arg0: i32) -> (i32, i32) {
    %c0_i32 = arith.constant 0 : i32
    %c0_i32_0 = arith.constant 0 : i32
    %c0_i32_1 = arith.constant 0 : i32
    return %c0_i32, %c0_i32_0 : i32, i32
  }
  func.func @transform_7(%arg0: i32) -> (i32, i32) {
    %c0_i32 = arith.constant 0 : i32
    %c0_i32_0 = arith.constant 0 : i32
    return %arg0, %c0_i32 : i32, i32
  }
}

</mosaic_0001>

<llo_original>
// kernel: attention_forward.1
$region0: #{attention_forward.1}
  #allocation0 [shape = 'u32[]', space=smem, size = 0x4, offset = 0x4, fixed_abs, tag = 'smem constant byte address 0x4 - core index']
  #allocation1 [shape = 'u32[144,128]{1,0:T(1,128)}', space=vmem, size = 0x12000, scoped, tag = 'internal scratch']
  %s0 = inlined_call_operand.vmem [shape: bf16[2,32], index: 0, kind: input, shape index: {}]
  %s1 = inlined_call_operand.vmem [shape: bf16[8,2,32], index: 1, kind: input, shape index: {}]
  %s2 = inlined_call_operand.vmem [shape: s32[2,8], index: 2, kind: input, shape index: {}]
  %s3 = inlined_call_operand.vmem [shape: bf16[32,32], index: 3, kind: input, shape index: {}]
  %s4 = inlined_call_operand.vmem [shape: bf16[32,32], index: 4, kind: input, shape index: {}]
  %s5 = inlined_call_operand.vmem [shape: f32[1,32], index: 5, kind: input, shape index: {}]
  %s6 = inlined_call_operand.vmem [shape: f32[1,32], index: 6, kind: input, shape index: {}]
  %s7 = inlined_call_operand.hbm [shape: f32[2,8], index: 7, kind: output, shape index: {}]
  %s8 = sld [smem:[#allocation0]]
  $region38: #{attention_forward.1} parent=0
    _
  %s10 = ssub.s32 1, %s8
  %s11 = scalar_select 0, %s10, %s8
  $region1: #{attention_forward.1} parent=0
    #allocation2 [shape = 'u8[1024]{0}', space=vmem, size = 0x400, scoped, tag = 'output window, operand 0, single buffered']
    #allocation3 [shape = 's32[1]{0}', space=sflag, size = 0x4, scoped, tag = 'scoped memory for attention_forward.1']
    %12 = vsyncpa [#allocation3], 0
    // Predicated region
    $region2: #{attention_forward.1} parent=1 // pred_check
      _
    $region3: #{attention_forward.1} parent=1 // pred_check_branch
      %14 = sbr.rel (0) target = $region5
    $region4: #{attention_forward.1} parent=1 // pred_region
      _
    $region5: #{attention_forward.1} parent=1 // pred_fallthru
      _
    // Predicated region
    $region6: #{attention_forward.1} parent=1 // pred_check
      _
    $region7: #{attention_forward.1} parent=1 // pred_check_branch
      %16 = sbr.rel (0) target = $region9
    $region8: #{attention_forward.1} parent=1 // pred_region
      _
    $region9: #{attention_forward.1} parent=1 // pred_fallthru
      _
    // Predicated region
    $region10: #{attention_forward.1} parent=1 // pred_check
      _
    $region11: #{attention_forward.1} parent=1 // pred_check_branch
      %18 = sbr.rel (0) target = $region13
    $region12: #{attention_forward.1} parent=1 // pred_region
      _
    $region13: #{attention_forward.1} parent=1 // pred_fallthru
      _
    // Predicated region
    $region14: #{attention_forward.1} parent=1 // pred_check
      _
    $region15: #{attention_forward.1} parent=1 // pred_check_branch
      %20 = sbr.rel (0) target = $region17
    $region16: #{attention_forward.1} parent=1 // pred_region
      _
    $region17: #{attention_forward.1} parent=1 // pred_fallthru
      _
    // Predicated region
    $region18: #{attention_forward.1} parent=1 // pred_check
      _
    $region19: #{attention_forward.1} parent=1 // pred_check_branch
      %22 = sbr.rel (0) target = $region21
    $region20: #{attention_forward.1} parent=1 // pred_region
      _
    $region21: #{attention_forward.1} parent=1 // pred_fallthru
      _
    // Predicated region
    $region22: #{attention_forward.1} parent=1 // pred_check
      _
    $region23: #{attention_forward.1} parent=1 // pred_check_branch
      %24 = sbr.rel (0) target = $region25
    $region24: #{attention_forward.1} parent=1 // pred_region
      _
    $region25: #{attention_forward.1} parent=1 // pred_fallthru
      _
    // Predicated region
    $region26: #{attention_forward.1} parent=1 // pred_check
      _
    $region27: #{attention_forward.1} parent=1 // pred_check_branch
      %26 = sbr.rel (0) target = $region29
    $region28: #{attention_forward.1} parent=1 // pred_region
      _
    $region29: #{attention_forward.1} parent=1 // pred_fallthru
      _
    %v28 = vld [vmem:[%s0] sm:$0x1]
    %v29 = vld [vmem:[%s3] sm:$0xf]
    %v30 = vld [vmem:[%s3 + $0x4] sm:$0xf]
    %v31 = vld [vmem:[%s3 + $0x8] sm:$0xf]
    %v32 = vld [vmem:[%s3 + $0xc] sm:$0xf]
    %v33 = vld [vmem:[%s5] sm:$0x1]
    %v35 = vlaneseq
    %v36 = vshrl.u32 %v35, 7
    %v37 = vsub.s32 0, %v36
    %v38 = vrot.slane %v33, %v37
    %v44 = vunpack.c.l.b16 %v29
    %v45 = vunpack.c.l.b16 %v30
    %v46 = vunpack.c.l.b16 %v31
    %v47 = vunpack.c.l.b16 %v32
    %v48 = vpack.c.b16 %v45, %v44
    %v49 = vpack.c.b16 %v47, %v46
    %vm52 = vcmask 261120
    %v54 = vsel %vm52, %v28, 0
    %56 = vmatprep.subr.bf16.mxu0 0
    %57 = vmatpush1.bf16.msra.mxu0 %v48
    %58 = vmatprep.subr.bf16.mxu0 0
    %59 = vmatpush1.bf16.msra.mxu0 %v49
    %60 = vmatprep.subr.bf16.mxu0 0
    %61 = vmatpush1.bf16.msra.mxu0 0
    %62 = vmatprep.subr.bf16.mxu0 0
    %63 = vmatpush1.bf16.msra.mxu0 0
    %64 = vmatprep.subr.bf16.mxu0 0
    %65 = vmatpush1.bf16.msra.mxu0 0
    %66 = vmatprep.subr.bf16.mxu0 0
    %67 = vmatpush1.bf16.msra.mxu0 0
    %68 = vmatprep.subr.bf16.mxu0 0
    %69 = vmatpush1.bf16.msra.mxu0 0
    %70 = vmatprep.subr.bf16.mxu0 0
    %71 = vmatpush1.bf16.msra.mxu0 0
    %72 = vmatprep.subr.bf16.mxu0 0
    %73 = vmatpush1.bf16.msra.mxu0 0
    %74 = vmatprep.subr.bf16.mxu0 0
    %75 = vmatpush1.bf16.msra.mxu0 0
    %76 = vmatprep.subr.bf16.mxu0 0
    %77 = vmatpush1.bf16.msra.mxu0 0
    %78 = vmatprep.subr.bf16.mxu0 0
    %79 = vmatpush1.bf16.msra.mxu0 0
    %80 = vmatprep.subr.bf16.mxu0 0
    %81 = vmatpush1.bf16.msra.mxu0 0
    %82 = vmatprep.subr.bf16.mxu0 0
    %83 = vmatpush1.bf16.msra.mxu0 0
    %84 = vmatprep.subr.bf16.mxu0 0
    %85 = vmatpush1.bf16.msra.mxu0 0
    %86 = vmatprep.subr.bf16.mxu0 0
    %87 = vmatpush1.bf16.msra.mxu0 0
    %88 = vmatprep.mubr.bf16.mxu0 0
    %89 = vmatmul.mubr.bf16.gmra.mrb[0].mxu0 %v54
    %v90 = vpop.f32.mrb[0].mxu0
    %v91 = vadd.f32 %v38, %v90
    %v92 = vpop.f32.mrb[0].mxu0
    %v93 = vpop.f32.mrb[0].mxu0
    %v94 = vpop.f32.mrb[0].mxu0
    %95 = vdwg.mxu0
    %v96 = vld [vmem:[%s1] sm:$0x1]
    %v97 = vld [vmem:[%s1 + $0x1] sm:$0x1]
    %v98 = vld [vmem:[%s1 + $0x2] sm:$0x1]
    %v99 = vld [vmem:[%s1 + $0x3] sm:$0x1]
    %v100 = vld [vmem:[%s1 + $0x4] sm:$0x1]
    %v101 = vld [vmem:[%s1 + $0x5] sm:$0x1]
    %v102 = vld [vmem:[%s1 + $0x6] sm:$0x1]
    %v103 = vld [vmem:[%s1 + $0x7] sm:$0x1]
    %v104 = vld [vmem:[%s4] sm:$0xf]
    %v105 = vld [vmem:[%s4 + $0x4] sm:$0xf]
    %v106 = vld [vmem:[%s4 + $0x8] sm:$0xf]
    %v107 = vld [vmem:[%s4 + $0xc] sm:$0xf]
    %v116 = vcombine.low %v96, %v97
    %v117 = vcombine.low %v98, %v99
    %v118 = vcombine.low %v100, %v101
    %v119 = vcombine.low %v102, %v103
    %v121 = vunpack.c.l.s4 1966171168
    %v122 = vunpack.c.0.s8 %v121
    %v123 = vlaneseq
    %v124 = vshrl.u32 %v123, 7
    %v125 = vsub.s32 %v122, %v124
    %v126 = vrot.slane %v116, %v125
    %v128 = vunpack.c.l.s4 1966171168
    %v129 = vunpack.c.0.s8 %v128
    %v130 = vlaneseq
    %v131 = vshrl.u32 %v130, 7
    %v132 = vsub.s32 %v129, %v131
    %v133 = vrot.slane %v117, %v132
    %v135 = vunpack.c.l.s4 1966171168
    %v136 = vunpack.c.0.s8 %v135
    %v137 = vlaneseq
    %v138 = vshrl.u32 %v137, 7
    %v139 = vsub.s32 %v136, %v138
    %v140 = vrot.slane %v118, %v139
    %v142 = vunpack.c.l.s4 1966171168
    %v143 = vunpack.c.0.s8 %v142
    %v144 = vlaneseq
    %v145 = vshrl.u32 %v144, 7
    %v146 = vsub.s32 %v143, %v145
    %v147 = vrot.slane %v119, %v146
    %v148 = vcombine.low %v126, %v133
    %v149 = vcombine.low %v140, %v147
    %v151 = vunpack.c.l.s4 1966171168
    %v152 = vunpack.c.0.s8 %v151
    %v153 = vlaneseq
    %v154 = vshrl.u32 %v153, 7
    %v155 = vsub.s32 %v152, %v154
    %v156 = vrot.slane %v148, %v155
    %v158 = vunpack.c.l.s4 1966171168
    %v159 = vunpack.c.0.s8 %v158
    %v160 = vlaneseq
    %v161 = vshrl.u32 %v160, 7
    %v162 = vsub.s32 %v159, %v161
    %v163 = vrot.slane %v149, %v162
    %v164 = vcombine.low %v156, %v163
    %v169 = vunpack.c.l.b16 %v104
    %v170 = vunpack.c.l.b16 %v105
    %v171 = vunpack.c.l.b16 %v106
    %v172 = vunpack.c.l.b16 %v107
    %v173 = vpack.c.b16 %v170, %v169
    %v174 = vpack.c.b16 %v172, %v171
    %v178 = vsel %vm52, %v164, 0
    %180 = vmatprep.subr.bf16.mxu0 0
    %181 = vmatpush1.bf16.msra.mxu0 %v173
    %182 = vmatprep.subr.bf16.mxu0 0
    %183 = vmatpush1.bf16.msra.mxu0 %v174
    %184 = vmatprep.subr.bf16.mxu0 0
    %185 = vmatpush1.bf16.msra.mxu0 0
    %186 = vmatprep.subr.bf16.mxu0 0
    %187 = vmatpush1.bf16.msra.mxu0 0
    %188 = vmatprep.subr.bf16.mxu0 0
    %189 = vmatpush1.bf16.msra.mxu0 0
    %190 = vmatprep.subr.bf16.mxu0 0
    %191 = vmatpush1.bf16.msra.mxu0 0
    %192 = vmatprep.subr.bf16.mxu0 0
    %193 = vmatpush1.bf16.msra.mxu0 0
    %194 = vmatprep.subr.bf16.mxu0 0
    %195 = vmatpush1.bf16.msra.mxu0 0
    %196 = vmatprep.subr.bf16.mxu0 0
    %197 = vmatpush1.bf16.msra.mxu0 0
    %198 = vmatprep.subr.bf16.mxu0 0
    %199 = vmatpush1.bf16.msra.mxu0 0
    %200 = vmatprep.subr.bf16.mxu0 0
    %201 = vmatpush1.bf16.msra.mxu0 0
    %202 = vmatprep.subr.bf16.mxu0 0
    %203 = vmatpush1.bf16.msra.mxu0 0
    %204 = vmatprep.subr.bf16.mxu0 0
    %205 = vmatpush1.bf16.msra.mxu0 0
    %206 = vmatprep.subr.bf16.mxu0 0
    %207 = vmatpush1.bf16.msra.mxu0 0
    %208 = vmatprep.subr.bf16.mxu0 0
    %209 = vmatpush1.bf16.msra.mxu0 0
    %210 = vmatprep.subr.bf16.mxu0 0
    %211 = vmatpush1.bf16.msra.mxu0 0
    %212 = vmatprep.mubr.bf16.mxu0 0
    %213 = vmatmul.mubr.bf16.gmra.mrb[0].mxu0 %v178
    %v214 = vpop.f32.mrb[0].mxu0
    %v215 = vadd.f32 0.0, %v214
    %v216 = vpop.f32.mrb[0].mxu0
    %v217 = vpop.f32.mrb[0].mxu0
    %v218 = vadd.f32 0.0, %v217
    %v219 = vpop.f32.mrb[0].mxu0
    %220 = vdwg.mxu0
    %v223 = vcombine.high %v215, %v215
    %v225 = vunpack.c.l.s4 1983009808
    %v226 = vunpack.c.0.s8 %v225
    %v227 = vlaneseq
    %v228 = vshrl.u32 %v227, 7
    %v229 = vsub.s32 %v226, %v228
    %v230 = vrot.slane %v215, %v229
    %v232 = vunpack.c.l.s4 1983009808
    %v233 = vunpack.c.0.s8 %v232
    %v234 = vlaneseq
    %v235 = vshrl.u32 %v234, 7
    %v236 = vsub.s32 %v233, %v235
    %v237 = vrot.slane %v223, %v236
    %v238 = vcombine.high %v230, %v230
    %v239 = vcombine.high %v237, %v237
    %v240 = vcombine.high %v218, %v218
    %v242 = vunpack.c.l.s4 1983009808
    %v243 = vunpack.c.0.s8 %v242
    %v244 = vlaneseq
    %v245 = vshrl.u32 %v244, 7
    %v246 = vsub.s32 %v243, %v245
    %v247 = vrot.slane %v218, %v246
    %v249 = vunpack.c.l.s4 1983009808
    %v250 = vunpack.c.0.s8 %v249
    %v251 = vlaneseq
    %v252 = vshrl.u32 %v251, 7
    %v253 = vsub.s32 %v250, %v252
    %v254 = vrot.slane %v240, %v253
    %v255 = vcombine.high %v247, %v247
    %v256 = vcombine.high %v254, %v254
    %v265 = vadd.f32 %v230, %v91
    %v266 = vadd.f32 %v238, %v91
    %v267 = vadd.f32 %v237, %v91
    %v268 = vadd.f32 %v239, %v91
    %v269 = vadd.f32 %v247, %v91
    %v270 = vadd.f32 %v255, %v91
    %v271 = vadd.f32 %v254, %v91
    %v272 = vadd.f32 %v256, %v91
    %v273 = vtanh.pop %v265
    %v274 = vtanh.pop %v266
    %v275 = vtanh.pop %v267
    %v276 = vtanh.pop %v268
    %v277 = vtanh.pop %v269
    %v278 = vtanh.pop %v270
    %v279 = vtanh.pop %v271
    %v280 = vtanh.pop %v272
    %v281 = vld [vmem:[%s6] sm:$0x1]
    %v283 = vlaneseq
    %v284 = vshrl.u32 %v283, 7
    %v285 = vsub.s32 0, %v284
    %v286 = vrot.slane %v281, %v285
    %v288 = vmul.f32 %v273, %v286
    %v289 = vmul.f32 %v274, %v286
    %v290 = vmul.f32 %v275, %v286
    %v291 = vmul.f32 %v276, %v286
    %v292 = vmul.f32 %v277, %v286
    %v293 = vmul.f32 %v278, %v286
    %v294 = vmul.f32 %v279, %v286
    %v295 = vmul.f32 %v280, %v286
    %vm296 = vcmask 254976
    %v297 = vsel %vm296, %v288, 0.0
    %298 = vadd.xlane.f32.xlu0 %v297
    %v299 = vpop.xlane.xlu0 %298
    %v300 = vsel %vm296, %v289, 0.0
    %301 = vadd.xlane.f32.xlu0 %v300
    %v302 = vpop.xlane.xlu0 %301
    %v303 = vsel %vm296, %v290, 0.0
    %304 = vadd.xlane.f32.xlu0 %v303
    %v305 = vpop.xlane.xlu0 %304
    %v306 = vsel %vm296, %v291, 0.0
    %307 = vadd.xlane.f32.xlu0 %v306
    %v308 = vpop.xlane.xlu0 %307
    %v309 = vsel %vm296, %v292, 0.0
    %310 = vadd.xlane.f32.xlu0 %v309
    %v311 = vpop.xlane.xlu0 %310
    %v312 = vsel %vm296, %v293, 0.0
    %313 = vadd.xlane.f32.xlu0 %v312
    %v314 = vpop.xlane.xlu0 %313
    %v315 = vsel %vm296, %v294, 0.0
    %316 = vadd.xlane.f32.xlu0 %v315
    %v317 = vpop.xlane.xlu0 %316
    %v318 = vsel %vm296, %v295, 0.0
    %319 = vadd.xlane.f32.xlu0 %v318
    %v320 = vpop.xlane.xlu0 %319
    %v329 = vlaneseq
    %v330 = vand.u32 %v329, 127
    %v331 = vlaneseq
    %v332 = vshrl.u32 %v331, 7
    %v333 = vsub.s32 %v330, %v332
    %v334 = vrot.slane %v299, %v333
    %v335 = vlaneseq
    %v336 = vshrl.u32 %v335, 7
    %v337 = vsub.s32 %v330, %v336
    %v338 = vrot.slane %v302, %v337
    %v339 = vlaneseq
    %v340 = vshrl.u32 %v339, 7
    %v341 = vsub.s32 %v330, %v340
    %v342 = vrot.slane %v305, %v341
    %v343 = vlaneseq
    %v344 = vshrl.u32 %v343, 7
    %v345 = vsub.s32 %v330, %v344
    %v346 = vrot.slane %v308, %v345
    %v347 = vlaneseq
    %v348 = vshrl.u32 %v347, 7
    %v349 = vsub.s32 %v330, %v348
    %v350 = vrot.slane %v311, %v349
    %v351 = vlaneseq
    %v352 = vshrl.u32 %v351, 7
    %v353 = vsub.s32 %v330, %v352
    %v354 = vrot.slane %v314, %v353
    %v355 = vlaneseq
    %v356 = vshrl.u32 %v355, 7
    %v357 = vsub.s32 %v330, %v356
    %v358 = vrot.slane %v317, %v357
    %v359 = vlaneseq
    %v360 = vshrl.u32 %v359, 7
    %v361 = vsub.s32 %v330, %v360
    %v362 = vrot.slane %v320, %v361
    %vm363 = vcmask 1041409
    %v364 = vsel %vm363, %v338, %v334
    %vm365 = vcmask 1042434
    %v366 = vsel %vm365, %v342, %v364
    %vm367 = vcmask 1043459
    %v368 = vsel %vm367, %v346, %v366
    %vm369 = vcmask 1044484
    %v370 = vsel %vm369, %v350, %v368
    %vm371 = vcmask 1045509
    %v372 = vsel %vm371, %v354, %v370
    %vm373 = vcmask 1046534
    %v374 = vsel %vm373, %v358, %v372
    %vm375 = vcmask 1047559
    %v376 = vsel %vm375, %v362, %v374
    %378 = vxpose.xlu0.b32.start [1/16] %v376, 128
    %379 = vxpose.xlu0.b32.cont [2/16] 0.0, 128
    %380 = vxpose.xlu0.b32.cont [3/16] 0.0, 128
    %381 = vxpose.xlu0.b32.cont [4/16] 0.0, 128
    %382 = vxpose.xlu0.b32.cont [5/16] 0.0, 128
    %383 = vxpose.xlu0.b32.cont [6/16] 0.0, 128
    %384 = vxpose.xlu0.b32.cont [7/16] 0.0, 128
    %385 = vxpose.xlu0.b32.cont [8/16] 0.0, 128
    %386 = vxpose.xlu0.b32.cont [9/16] 0.0, 128
    %387 = vxpose.xlu0.b32.cont [10/16] 0.0, 128
    %388 = vxpose.xlu0.b32.cont [11/16] 0.0, 128
    %389 = vxpose.xlu0.b32.cont [12/16] 0.0, 128
    %390 = vxpose.xlu0.b32.cont [13/16] 0.0, 128
    %391 = vxpose.xlu0.b32.cont [14/16] 0.0, 128
    %392 = vxpose.xlu0.b32.cont [15/16] 0.0, 128
    %393 = vxpose.xlu0.b32.end [16/16] 0.0, 128
    %v394 = vpop.trf.xlu0
    %v395 = vpop.trf.xlu0
    %v396 = vpop.trf.xlu0
    %v397 = vpop.trf.xlu0
    %v398 = vpop.trf.xlu0
    %v399 = vpop.trf.xlu0
    %v400 = vpop.trf.xlu0
    %v401 = vpop.trf.xlu0
    %v402 = vpop.trf.xlu0
    %v403 = vpop.trf.xlu0
    %v404 = vpop.trf.xlu0
    %v405 = vpop.trf.xlu0
    %v406 = vpop.trf.xlu0
    %v407 = vpop.trf.xlu0
    %v408 = vpop.trf.xlu0
    %v409 = vpop.trf.xlu0
    %v410 = vld [vmem:[%s2] sm:$0x3]
    %vm411 = vcmp.eq.s32.totalorder %v410, 0
    %v412 = vsel %vm411, -1e+10, %v394
    %vm413 = vcmask 58368
    %v414 = vsel %vm413, %v412, -inf
    %415 = vmax.xlane.f32.xlu0 %v414
    %v416 = vpop.xlane.xlu0 %415
    %v417 = vsub.f32 %v412, %v416
    %v418 = vmul.f32 %v417, 1.442695
    %v419 = vpow.pop %v418
    %v420 = vsel %vm413, %v419, 0.0
    %421 = vadd.xlane.f32.xlu0 %v420
    %v422 = vpop.xlane.xlu0 %421
    %v423 = vrcp.pop %v422
    %v424 = vmul.f32 %v419, %v423
    %425 = vst.msk [vmem:[#allocation2] sm:$0x3] %vm413, %v424
    // Predicated region
    $region30: #{attention_forward.1} parent=1 // pred_check
      _
    $region31: #{attention_forward.1} parent=1 // pred_check_branch
      %427 = sbr.rel (0) target = $region33
    $region32: #{attention_forward.1} parent=1 // pred_region
      %s429 = ssub.s32 32, 32
      %430 = vsyncadd [#allocation3], %s429
      %s432 = sshll.u32 [#allocation2], 4
      %s433 = int_to_ptr.vmem [resolvable:$true] %s432
      %435 = dma.vmem_to_hbm [thread:$0]  %s433, 32, %s7, [#allocation3]
    $region33: #{attention_forward.1} parent=1 // pred_fallthru
      _
    // Predicated region
    $region34: #{attention_forward.1} parent=1 // pred_check
      _
    $region35: #{attention_forward.1} parent=1 // pred_check_branch
      %437 = sbr.rel (0) target = $region37
    $region36: #{attention_forward.1} parent=1 // pred_region
      %438 = dma.done [#allocation3], 32
    $region37: #{attention_forward.1} parent=1 // pred_fallthru
      _
    %439 = vsyncpa [#allocation3], 1

</llo_original>
